<compile_context>
chip_gen: v7x
topology: tpu7x:2x2x1
jax: 0.10.0
libtpu: 0.0.40
codegen_flags: <defaults>
</compile_context>

<pallas_src>
import functools

import jax
import jax.numpy as jnp
from jax.experimental import pallas as pl
from jax.experimental.pallas import tpu as pltpu

_LANES = 128
_SUBL = 16   # sublane granularity safe for both f32 (8) and bf16 (16) packing


def _cdiv(a, b):
    return -(-a // b)


def _round_up(a, b):
    return _cdiv(a, b) * b


def _univariate_kernel(x_ref, p_ref, o_ref, *, activate_output):
    """Elementwise 1->4->1 MLP, fully unrolled on the VPU/EUP (no MXU).

    x_ref: (BR, 128) lane-dense tile of inputs (dim==1, flattened batch).
    p_ref: (13,) SMEM scalars, tanh-folded:
           [w1'_0..3, b1'_0..3, w2'_0..3, b2'] with w1'=w1/2, b1'=b1/2,
           w2'=w2/2, b2'=b2+sum(w2)/2, so that
           sigmoid(x*w1+b1) @ w2 + b2 == sum_j tanh(x*w1'_j+b1'_j)*w2'_j + b2'.
    o_ref: (BR, 128) lane-dense output tile.
    """
    x = x_ref[...].astype(jnp.float32)
    # j == 0 also folds in b2' -> no separate accumulator-init tile op.
    acc = jnp.tanh(x * p_ref[0] + p_ref[4]) * p_ref[8] + p_ref[12]
    for j in range(1, 4):                              # fully unrolled hidden dim
        acc = acc + jnp.tanh(x * p_ref[j] + p_ref[4 + j]) * p_ref[8 + j]
    if activate_output:
        # PyTorch Softplus default (beta=1, threshold=20): linear above threshold.
        sp = jnp.log1p(jnp.exp(jnp.minimum(acc, 20.0)))   # clamp keeps exp finite
        acc = jnp.where(acc > 20.0, acc, sp)
    o_ref[...] = acc.astype(o_ref.dtype)


def univariate_net(x, params, *, activate_output=False, block_rows=8192):
    """Forward pass of UnivariateNet (dim == 1) as a Pallas TPU kernel.

    x      : (N, 1) float32 or bfloat16.
    params : dict with w1 (1,4), b1 (4,), w2 (4,1), b2 (1,)
             (stored (in, out), i.e. transposed vs. torch nn.Linear weights).
    """
    n, dim = x.shape
    if dim != 1:
        # TODO(synk): generalize the lane-dense path to dim > 1 (small-K matmul
        # or per-feature broadcast); UnivariateNet's default dim is 1.
        raise NotImplementedError("Pallas kernel implemented for dim == 1")

    # Fold sigmoid -> tanh on the host: sigmoid(z) = 0.5 + 0.5*tanh(z/2).
    w1 = params["w1"].reshape(-1).astype(jnp.float32)
    b1 = params["b1"].reshape(-1).astype(jnp.float32)
    w2 = params["w2"].reshape(-1).astype(jnp.float32)
    b2 = params["b2"].reshape(-1).astype(jnp.float32)
    p = jnp.concatenate([0.5 * w1, 0.5 * b1, 0.5 * w2,
                         b2 + 0.5 * jnp.sum(w2, keepdims=True)])   # (13,) SMEM

    io_dtype = x.dtype     # bf16 in -> bf16 out halves HBM bytes on v6e/v7x

    # Lane-dense layout: view the flat batch as (rows, 128).
    r = _cdiv(n, _LANES)
    if n % _LANES == 0:
        r_use = r                                       # zero-copy reshape path
        x2 = jnp.reshape(x, (r_use, _LANES))
    else:
        # TODO(synk): this pad and the depad slice below each add one HBM pass
        # for unaligned N; an in-kernel masked tail (manual DMA) would remove them.
        r_use = _round_up(r, _SUBL)
        x2 = jnp.pad(jnp.ravel(x), (0, r_use * _LANES - n)).reshape(r_use, _LANES)

    # Tile rows: capped by block_rows and by ~half the rows so the "parallel"
    # grid axis has >= 2 blocks (lets v7x shard across its two TensorCores).
    br_cap = _round_up(max(block_rows, _SUBL), _SUBL)
    br = min(br_cap, _round_up(_cdiv(r_use, 2), _SUBL))
    if br >= r_use:
        br = r_use            # single block == full array dims (always legal)
    grid = _cdiv(r_use, br)   # last block may be partial (Pallas masks it)

    kernel = functools.partial(_univariate_kernel,
                               activate_output=activate_output)

    out2 = pl.pallas_call(
        kernel,
        out_shape=jax.ShapeDtypeStruct((r_use, _LANES), io_dtype),
        grid_spec=pltpu.PrefetchScalarGridSpec(
            num_scalar_prefetch=0,
            grid=(grid,),
            in_specs=[
                pl.BlockSpec((br, _LANES), lambda i: (i, 0)),        # x tile
                pl.BlockSpec(memory_space=pltpu.MemorySpace.SMEM),   # 13 scalars
            ],
            out_specs=pl.BlockSpec((br, _LANES), lambda i: (i, 0)),
        ),
        compiler_params=pltpu.CompilerParams(
            dimension_semantics=("parallel",),
            vmem_limit_bytes=32 * 1024 * 1024,
        ),
    )(x2, p)

    if r_use * _LANES == n:
        return out2.reshape(n, 1)
    return out2.reshape(-1)[:n].reshape(n, 1)


def _reference(x, params, activate_output):
    z1 = x @ params["w1"] + params["b1"][None, :]
    h = jax.nn.sigmoid(z1)
    z2 = h @ params["w2"] + params["b2"][None, :]
    if activate_output:
        z2 = jnp.where(z2 > 20.0, z2, jnp.log1p(jnp.exp(jnp.minimum(z2, 20.0))))
    return z2


if __name__ == "__main__":
    key = jax.random.PRNGKey(0)
    dim = 1
    k_x, k_w1, k_b1, k_w2, k_b2 = jax.random.split(key, 5)

    # Deterministic parameters (shapes of nn.Linear(1,4) / nn.Linear(4,1)),
    # stored as (in, out) so the math is x @ W + b.
    params = {
        "w1": jax.random.normal(k_w1, (dim, 4), dtype=jnp.float32) * 0.5,
        "b1": jax.random.normal(k_b1, (4,), dtype=jnp.float32) * 0.1,
        "w2": jax.random.normal(k_w2, (4, 1), dtype=jnp.float32) * 0.5,
        "b2": jax.random.normal(k_b2, (1,), dtype=jnp.float32) * 0.1,
    }

    # (n, block_rows, dtype, tol):
    #   300   -> unaligned N, single padded block
    #   2500  -> unaligned N, 2-block grid (v7x split rule)
    #   2688  -> 128-aligned N, zero-copy path, partial last block
    #   20000 -> small forced tile -> 5-block grid
    #   4096  -> bf16 I/O path (v6e/v7x HBM win), looser tolerance
    cases = [
        (300, 8192, jnp.float32, 1e-5),
        (2500, 8192, jnp.float32, 1e-5),
        (2688, 8192, jnp.float32, 1e-5),
        (20000, 32, jnp.float32, 1e-5),
        (4096, 8192, jnp.bfloat16, 2e-2),
    ]
    for n, block_rows, dtype, tol in cases:
        x = jax.random.normal(k_x, (n, dim), dtype=jnp.float32).astype(dtype)
        for activate_output in (False, True):
            ref = _reference(x.astype(jnp.float32), params, activate_output)
            out = univariate_net(x, params, activate_output=activate_output,
                                 block_rows=block_rows)
            out = jax.block_until_ready(out)
            assert out.shape == (n, 1), (n, out.shape)
            assert out.dtype == dtype, (dtype, out.dtype)
            assert jnp.allclose(out.astype(jnp.float32), ref,
                                atol=tol, rtol=tol), (
                f"mismatch n={n}, dtype={dtype}, activate_output={activate_output}")

    print("KERNEL_OK")
</pallas_src>

<mosaic_0001>
module attributes {stable_mosaic.version = 11 : i64} {
  func.func @_univariate_kernel(%arg0: i32, %arg1: memref<16x128xf32, #tpu.memory_space<vmem>>, %arg2: memref<13xf32, #tpu.memory_space<smem>>, %arg3: memref<16x128xf32, #tpu.memory_space<vmem>>) attributes {dimension_semantics = [#tpu.dimension_semantics<parallel>], iteration_bounds = array<i64: 1>, scalar_prefetch = 0 : i64, scratch_operands = 0 : i64, tpu.core_type = #tpu.core_type<tc>, window_params = [{transform_indices = @transform_0, window_bounds = array<i64: 16, 128>}, {transform_indices = @transform_1, window_bounds = array<i64: 13>}, {transform_indices = @transform_2, window_bounds = array<i64: 16, 128>}]} {
    %c0 = arith.constant 0 : index
    %c0_0 = arith.constant 0 : index
    %0 = vector.load %arg1[%c0, %c0_0] : memref<16x128xf32, #tpu.memory_space<vmem>>, vector<16x128xf32>
    %c0_1 = arith.constant 0 : index
    %1 = memref.load %arg2[%c0_1] : memref<13xf32, #tpu.memory_space<smem>>
    %2 = vector.broadcast %1 : f32 to vector<16x128xf32>
    %3 = arith.mulf %0, %2 : vector<16x128xf32>
    %c4 = arith.constant 4 : index
    %4 = memref.load %arg2[%c4] : memref<13xf32, #tpu.memory_space<smem>>
    %5 = vector.broadcast %4 : f32 to vector<16x128xf32>
    %6 = arith.addf %3, %5 : vector<16x128xf32>
    %7 = math.tanh %6 : vector<16x128xf32>
    %c8 = arith.constant 8 : index
    %8 = memref.load %arg2[%c8] : memref<13xf32, #tpu.memory_space<smem>>
    %9 = vector.broadcast %8 : f32 to vector<16x128xf32>
    %10 = arith.mulf %7, %9 : vector<16x128xf32>
    %c12 = arith.constant 12 : index
    %11 = memref.load %arg2[%c12] : memref<13xf32, #tpu.memory_space<smem>>
    %12 = vector.broadcast %11 : f32 to vector<16x128xf32>
    %13 = arith.addf %10, %12 : vector<16x128xf32>
    %c1 = arith.constant 1 : index
    %14 = memref.load %arg2[%c1] : memref<13xf32, #tpu.memory_space<smem>>
    %15 = vector.broadcast %14 : f32 to vector<16x128xf32>
    %16 = arith.mulf %0, %15 : vector<16x128xf32>
    %c5 = arith.constant 5 : index
    %17 = memref.load %arg2[%c5] : memref<13xf32, #tpu.memory_space<smem>>
    %18 = vector.broadcast %17 : f32 to vector<16x128xf32>
    %19 = arith.addf %16, %18 : vector<16x128xf32>
    %20 = math.tanh %19 : vector<16x128xf32>
    %c9 = arith.constant 9 : index
    %21 = memref.load %arg2[%c9] : memref<13xf32, #tpu.memory_space<smem>>
    %22 = vector.broadcast %21 : f32 to vector<16x128xf32>
    %23 = arith.mulf %20, %22 : vector<16x128xf32>
    %24 = arith.addf %13, %23 : vector<16x128xf32>
    %c2 = arith.constant 2 : index
    %25 = memref.load %arg2[%c2] : memref<13xf32, #tpu.memory_space<smem>>
    %26 = vector.broadcast %25 : f32 to vector<16x128xf32>
    %27 = arith.mulf %0, %26 : vector<16x128xf32>
    %c6 = arith.constant 6 : index
    %28 = memref.load %arg2[%c6] : memref<13xf32, #tpu.memory_space<smem>>
    %29 = vector.broadcast %28 : f32 to vector<16x128xf32>
    %30 = arith.addf %27, %29 : vector<16x128xf32>
    %31 = math.tanh %30 : vector<16x128xf32>
    %c10 = arith.constant 10 : index
    %32 = memref.load %arg2[%c10] : memref<13xf32, #tpu.memory_space<smem>>
    %33 = vector.broadcast %32 : f32 to vector<16x128xf32>
    %34 = arith.mulf %31, %33 : vector<16x128xf32>
    %35 = arith.addf %24, %34 : vector<16x128xf32>
    %c3 = arith.constant 3 : index
    %36 = memref.load %arg2[%c3] : memref<13xf32, #tpu.memory_space<smem>>
    %37 = vector.broadcast %36 : f32 to vector<16x128xf32>
    %38 = arith.mulf %0, %37 : vector<16x128xf32>
    %c7 = arith.constant 7 : index
    %39 = memref.load %arg2[%c7] : memref<13xf32, #tpu.memory_space<smem>>
    %40 = vector.broadcast %39 : f32 to vector<16x128xf32>
    %41 = arith.addf %38, %40 : vector<16x128xf32>
    %42 = math.tanh %41 : vector<16x128xf32>
    %c11 = arith.constant 11 : index
    %43 = memref.load %arg2[%c11] : memref<13xf32, #tpu.memory_space<smem>>
    %44 = vector.broadcast %43 : f32 to vector<16x128xf32>
    %45 = arith.mulf %42, %44 : vector<16x128xf32>
    %46 = arith.addf %35, %45 : vector<16x128xf32>
    %c0_2 = arith.constant 0 : index
    %c0_3 = arith.constant 0 : index
    %47 = vector.load %arg3[%c0_2, %c0_3] : memref<16x128xf32, #tpu.memory_space<vmem>>, vector<16x128xf32>
    tpu.vector_store %arg3[%c0_2, %c0_3], %46 {strides = array<i32>} : memref<16x128xf32, #tpu.memory_space<vmem>>, vector<16x128xf32>,
    return
  }
  func.func @transform_0(%arg0: i32) -> (i32, i32) {
    %c0_i32 = arith.constant 0 : i32
    %c0_i32_0 = arith.constant 0 : i32
    return %arg0, %c0_i32 : i32, i32
  }
  func.func @transform_1(%arg0: i32) -> i32 {
    %c0_i32 = arith.constant 0 : i32
    %c0_i32_0 = arith.constant 0 : i32
    return %c0_i32 : i32
  }
  func.func @transform_2(%arg0: i32) -> (i32, i32) {
    %c0_i32 = arith.constant 0 : i32
    %c0_i32_0 = arith.constant 0 : i32
    return %arg0, %c0_i32 : i32, i32
  }
}

</mosaic_0001>

<llo_original>
// kernel: tpu_custom_call.1
$region0: #{tpu_custom_call.1}
  #allocation0 [shape = 'u32[]', space=smem, size = 0x4, offset = 0x4, fixed_abs, tag = 'smem constant byte address 0x4 - core index']
  #allocation1 [shape = 'u32[144,128]{1,0:T(1,128)}', space=vmem, size = 0x12000, scoped, tag = 'internal scratch']
  %s0 = inlined_call_operand.hbm [shape: f32[16,128], index: 0, kind: input, shape index: {}]
  %s1 = inlined_call_operand.vmem [shape: f32[13], index: 1, kind: input, shape index: {}]
  %s2 = inlined_call_operand.hbm [shape: f32[16,128], index: 2, kind: output, shape index: {}]
  %s3 = sld [smem:[#allocation0]]
  $region26: #{tpu_custom_call.1} parent=0
    _
  %s5 = ssub.s32 1, %s3
  %s6 = scalar_select 0, %s5, %s3
  $region1: #{tpu_custom_call.1} parent=0
    #allocation2 [shape = 'u8[8192]{0}', space=vmem, size = 0x2000, scoped, tag = 'input window, operand 0, single buffered']
    #allocation3 [shape = 's32[1]{0}', space=sflag, size = 0x4, scoped, tag = 'scoped memory for tpu_custom_call.1']
    #allocation4 [shape = 's32[1]{0}', space=sflag, size = 0x4, scoped, tag = 'scoped memory for tpu_custom_call.1']
    #allocation5 [shape = 's32[1]{0}', space=sflag, size = 0x4, scoped, tag = 'scoped memory for tpu_custom_call.1']
    #allocation6 [shape = 'u8[512]{0}', space=smem, size = 0x200, scoped, tag = 'input window, operand 1, single buffered']
    #allocation7 [shape = 'u8[8192]{0}', space=vmem, size = 0x2000, scoped, tag = 'output window, operand 0, single buffered']
    %7 = vsyncpa [#allocation3], 0
    %8 = vsyncpa [#allocation5], 0
    %9 = vsyncpa [#allocation4], 0
    // Predicated region
    $region2: #{tpu_custom_call.1} parent=1 // pred_check
      _
    $region3: #{tpu_custom_call.1} parent=1 // pred_check_branch
      %11 = sbr.rel (0) target = $region5
    $region4: #{tpu_custom_call.1} parent=1 // pred_region
      %s13 = ssub.s32 256, 256
      %14 = vsyncadd [#allocation3], %s13
      %s15 = sshll.u32 [#allocation2], 4
      %s16 = int_to_ptr.vmem [resolvable:$true] %s15
      %21 = dma.hbm_to_vmem [thread:$0]  %s0, 256, %s16, [#allocation3], 128, 128, 8
    $region5: #{tpu_custom_call.1} parent=1 // pred_fallthru
      _
    // Predicated region
    $region6: #{tpu_custom_call.1} parent=1 // pred_check
      _
    $region7: #{tpu_custom_call.1} parent=1 // pred_check_branch
      %23 = sbr.rel (0) target = $region9
    $region8: #{tpu_custom_call.1} parent=1 // pred_region
      %s25 = ssub.s32 16, 16
      %26 = vsyncadd [#allocation5], %s25
      %s28 = sshll.u32 %s1, 4
      %s29 = int_to_ptr.vmem [resolvable:$true] %s28
      %31 = dma.vmem_to_smem %s29, 16, [#allocation6], [#allocation5]
    $region9: #{tpu_custom_call.1} parent=1 // pred_fallthru
      _
    // Predicated region
    $region10: #{tpu_custom_call.1} parent=1 // pred_check
      _
    $region11: #{tpu_custom_call.1} parent=1 // pred_check_branch
      %33 = sbr.rel (0) target = $region13
    $region12: #{tpu_custom_call.1} parent=1 // pred_region
      %34 = dma.done [#allocation3], 256
    $region13: #{tpu_custom_call.1} parent=1 // pred_fallthru
      _
    // Predicated region
    $region14: #{tpu_custom_call.1} parent=1 // pred_check
      _
    $region15: #{tpu_custom_call.1} parent=1 // pred_check_branch
      %36 = sbr.rel (0) target = $region17
    $region16: #{tpu_custom_call.1} parent=1 // pred_region
      %37 = dma.done [#allocation5], 16
    $region17: #{tpu_custom_call.1} parent=1 // pred_fallthru
      _
    %38 = sfence
    %v39 = vld [vmem:[#allocation2] sm:$0xff]
    %v40 = vld [vmem:[#allocation2 + $0x8] sm:$0xff]
    %s41 = sld [smem:[#allocation6]]
    %v42 = vstv %s41
    %v43 = vmul.f32 %v39, %v42
    %v44 = vmul.f32 %v40, %v42
    %s45 = sld [smem:[#allocation6 + $0x4]]
    %v46 = vstv %s45
    %v47 = vadd.f32 %v43, %v46
    %v48 = vadd.f32 %v44, %v46
    %v49 = vtanh.pop %v47
    %v50 = vtanh.pop %v48
    %s51 = sld [smem:[#allocation6 + $0x8]]
    %v52 = vstv %s51
    %v53 = vmul.f32 %v49, %v52
    %v54 = vmul.f32 %v50, %v52
    %s55 = sld [smem:[#allocation6 + $0xc]]
    %v56 = vstv %s55
    %v57 = vadd.f32 %v53, %v56
    %v58 = vadd.f32 %v54, %v56
    %s59 = sld [smem:[#allocation6 + $0x1]]
    %v60 = vstv %s59
    %v61 = vmul.f32 %v39, %v60
    %v62 = vmul.f32 %v40, %v60
    %s63 = sld [smem:[#allocation6 + $0x5]]
    %v64 = vstv %s63
    %v65 = vadd.f32 %v61, %v64
    %v66 = vadd.f32 %v62, %v64
    %v67 = vtanh.pop %v65
    %v68 = vtanh.pop %v66
    %s69 = sld [smem:[#allocation6 + $0x9]]
    %v70 = vstv %s69
    %v71 = vmul.f32 %v67, %v70
    %v72 = vmul.f32 %v68, %v70
    %v73 = vadd.f32 %v57, %v71
    %v74 = vadd.f32 %v58, %v72
    %s75 = sld [smem:[#allocation6 + $0x2]]
    %v76 = vstv %s75
    %v77 = vmul.f32 %v39, %v76
    %v78 = vmul.f32 %v40, %v76
    %s79 = sld [smem:[#allocation6 + $0x6]]
    %v80 = vstv %s79
    %v81 = vadd.f32 %v77, %v80
    %v82 = vadd.f32 %v78, %v80
    %v83 = vtanh.pop %v81
    %v84 = vtanh.pop %v82
    %s85 = sld [smem:[#allocation6 + $0xa]]
    %v86 = vstv %s85
    %v87 = vmul.f32 %v83, %v86
    %v88 = vmul.f32 %v84, %v86
    %v89 = vadd.f32 %v73, %v87
    %v90 = vadd.f32 %v74, %v88
    %s91 = sld [smem:[#allocation6 + $0x3]]
    %v92 = vstv %s91
    %v93 = vmul.f32 %v39, %v92
    %v94 = vmul.f32 %v40, %v92
    %s95 = sld [smem:[#allocation6 + $0x7]]
    %v96 = vstv %s95
    %v97 = vadd.f32 %v93, %v96
    %v98 = vadd.f32 %v94, %v96
    %v99 = vtanh.pop %v97
    %v100 = vtanh.pop %v98
    %s101 = sld [smem:[#allocation6 + $0xb]]
    %v102 = vstv %s101
    %v103 = vmul.f32 %v99, %v102
    %v104 = vmul.f32 %v100, %v102
    %v105 = vadd.f32 %v89, %v103
    %v106 = vadd.f32 %v90, %v104
    %107 = vst [vmem:[#allocation7] sm:$0xff] %v105
    %108 = vst [vmem:[#allocation7 + $0x8] sm:$0xff] %v106
    // Predicated region
    $region18: #{tpu_custom_call.1} parent=1 // pred_check
      _
    $region19: #{tpu_custom_call.1} parent=1 // pred_check_branch
      %110 = sbr.rel (0) target = $region21
    $region20: #{tpu_custom_call.1} parent=1 // pred_region
      %s112 = ssub.s32 256, 256
      %113 = vsyncadd [#allocation4], %s112
      %s114 = sshll.u32 [#allocation7], 4
      %s115 = int_to_ptr.vmem [resolvable:$true] %s114
      %120 = dma.vmem_to_hbm [thread:$0]  %s115, 256, %s2, [#allocation4], 128, 128, 8
    $region21: #{tpu_custom_call.1} parent=1 // pred_fallthru
      _
    // Predicated region
    $region22: #{tpu_custom_call.1} parent=1 // pred_check
      _
    $region23: #{tpu_custom_call.1} parent=1 // pred_check_branch
      %122 = sbr.rel (0) target = $region25
    $region24: #{tpu_custom_call.1} parent=1 // pred_region
      %123 = dma.done [#allocation4], 256
    $region25: #{tpu_custom_call.1} parent=1 // pred_fallthru
      _
    %124 = vsyncpa [#allocation3], 1
    %125 = vsyncpa [#allocation4], 1
    %126 = vsyncpa [#allocation5], 1

</llo_original>
